<compile_context>
chip_gen: v7x
topology: tpu7x:2x2x1
jax: 0.10.0
libtpu: 0.0.40
codegen_flags: <defaults>
</compile_context>

<pallas_src>
import jax
import jax.numpy as jnp
from jax import lax
from jax.experimental import pallas as pl
from jax.experimental.pallas import tpu as pltpu

LANE = 128
ROW_ALIGN = 16                       # bf16 sublane packing
COMPUTE_DTYPE = jnp.bfloat16         # MXU operand dtype (fp32 accumulation)


def _round_up(v, m):
    return (v + m - 1) // m * m


def _pad2(a, rows, cols):
    return jnp.pad(a, ((0, rows - a.shape[0]), (0, cols - a.shape[1])))


# ---------------------------------------------------------------------------
# Fused NodeModel kernel
# ---------------------------------------------------------------------------

def _node_model_kernel(dest_ref, e_ref, x_ref, batch_ref, u_ref,
                       w1x_ref, w1e_ref, w1u_ref, b1_ref, w2_ref, b2_ref,
                       o_ref, acc_ref):
    s = pl.program_id(0)                         # node-tile index (parallel)
    r = pl.program_id(1)                         # edge-tile index (reduction)

    tile_n = acc_ref.shape[0]
    tile_e = e_ref.shape[0]

    @pl.when(r == 0)
    def _init():
        acc_ref[...] = jnp.zeros_like(acc_ref)

    # ---- scatter_add(e, dest) for this node tile / edge slab, on the MXU ----
    node_ids = s * tile_n + lax.broadcasted_iota(jnp.int32, (tile_n, tile_e), 0)
    onehot = (node_ids == dest_ref[...]).astype(jnp.float32).astype(COMPUTE_DTYPE)
    acc_ref[...] += jnp.dot(onehot, e_ref[...],
                            preferred_element_type=jnp.float32)

    # ---- last edge slab: fused MLP over the (never materialized) concat ----
    @pl.when(r == pl.num_programs(1) - 1)
    def _finalize():
        n_graphs = u_ref.shape[0]
        # u[batch] as a one-hot matmul (gather fused into the kernel).
        graph_ids = lax.broadcasted_iota(jnp.int32, (tile_n, n_graphs), 1)
        onehot_b = (graph_ids == batch_ref[...]).astype(jnp.float32).astype(COMPUTE_DTYPE)
        u_n = jnp.dot(onehot_b, u_ref[...],
                      preferred_element_type=jnp.float32)          # (TILE_N, F_u)

        h = jnp.dot(x_ref[...], w1x_ref[...],
                    preferred_element_type=jnp.float32)
        h = h + jnp.dot(acc_ref[...].astype(COMPUTE_DTYPE), w1e_ref[...],
                        preferred_element_type=jnp.float32)
        h = h + jnp.dot(u_n.astype(COMPUTE_DTYPE), w1u_ref[...],
                        preferred_element_type=jnp.float32)
        h = jnp.maximum(h + b1_ref[...], 0.0)
        o = jnp.dot(h.astype(COMPUTE_DTYPE), w2_ref[...],
                    preferred_element_type=jnp.float32) + b2_ref[...]
        o_ref[...] = o.astype(o_ref.dtype)


# ---------------------------------------------------------------------------
# Wrapper: padding, tiling, pallas_call
# ---------------------------------------------------------------------------

def node_model_forward(params, x, edge_index, e, u, batch,
                       *, max_tile_n=256, max_tile_e=512):
    if e.shape[0] == 0:                 # matches `if not len(e): return`
        return None

    n, f_x = x.shape
    n_e, f_e = e.shape
    n_g, f_u = u.shape
    dest = edge_index[1].astype(jnp.int32)
    batch = batch.astype(jnp.int32)

    w1, b1, w2, b2 = params["w1"], params["b1"], params["w2"], params["b2"]
    assert w1.shape[0] == f_x + f_e + f_u
    hidden = w1.shape[1]
    f_out = w2.shape[1]
    # Split W1 by concat segment order: [x | e_agg_node | u[batch]].
    w1x, w1e, w1u = w1[:f_x], w1[f_x:f_x + f_e], w1[f_x + f_e:]

    # ---- lane-dense / tile-aligned padded layout ----
    fxp = _round_up(f_x, LANE)
    fep = _round_up(f_e, LANE)
    fup = _round_up(f_u, LANE)
    hp = _round_up(hidden, LANE)
    fop = _round_up(f_out, LANE)

    tile_n = min(max_tile_n, _round_up(n, ROW_ALIGN))
    n_pad = _round_up(n, tile_n)
    tile_e = min(max_tile_e, _round_up(n_e, ROW_ALIGN))
    e_pad = _round_up(n_e, tile_e)
    ngp = _round_up(n_g, ROW_ALIGN)

    x_p = _pad2(x.astype(jnp.float32), n_pad, fxp).astype(COMPUTE_DTYPE)
    e_p = _pad2(e.astype(jnp.float32), e_pad, fep).astype(COMPUTE_DTYPE)
    u_p = _pad2(u.astype(jnp.float32), ngp, fup).astype(COMPUTE_DTYPE)
    # Padded edge rows are all-zero, so dest padding value 0 contributes nothing.
    dest_p = jnp.pad(dest, (0, e_pad - n_e)).reshape(1, e_pad)
    batch_p = jnp.pad(batch, (0, n_pad - n)).reshape(n_pad, 1)

    w1x_p = _pad2(w1x, fxp, hp).astype(COMPUTE_DTYPE)
    w1e_p = _pad2(w1e, fep, hp).astype(COMPUTE_DTYPE)
    w1u_p = _pad2(w1u, fup, hp).astype(COMPUTE_DTYPE)
    w2_p = _pad2(w2, hp, fop).astype(COMPUTE_DTYPE)
    b1_p = jnp.pad(b1, (0, hp - hidden)).reshape(1, hp).astype(jnp.float32)
    b2_p = jnp.pad(b2, (0, fop - f_out)).reshape(1, fop).astype(jnp.float32)

    n_s = n_pad // tile_n
    n_r = e_pad // tile_e
    grid = (n_s, n_r)

    flops = int(2 * n_pad * (e_pad * fep + ngp * fup
                             + (fxp + fep + fup) * hp + hp * fop))
    bytes_accessed = int(
        n_s * (e_p.size * 2 + dest_p.size * 4)          # edge slabs per node tile
        + x_p.size * 2 + batch_p.size * 4 + u_p.size * 2
        + (w1x_p.size + w1e_p.size + w1u_p.size + w2_p.size) * 2
        + (b1_p.size + b2_p.size) * 4
        + n_pad * fop * 4)

    out_p = pl.pallas_call(
        _node_model_kernel,
        grid=grid,
        in_specs=[
            pl.BlockSpec((1, tile_e), lambda s, r: (0, r)),       # dest indices
            pl.BlockSpec((tile_e, fep), lambda s, r: (r, 0)),     # edge features
            pl.BlockSpec((tile_n, fxp), lambda s, r: (s, 0)),     # node features
            pl.BlockSpec((tile_n, 1), lambda s, r: (s, 0)),       # batch (graph id per node)
            pl.BlockSpec((ngp, fup), lambda s, r: (0, 0)),        # u (VMEM-resident)
            pl.BlockSpec((fxp, hp), lambda s, r: (0, 0)),         # W1[x rows]
            pl.BlockSpec((fep, hp), lambda s, r: (0, 0)),         # W1[e_agg rows]
            pl.BlockSpec((fup, hp), lambda s, r: (0, 0)),         # W1[u rows]
            pl.BlockSpec((1, hp), lambda s, r: (0, 0)),           # b1
            pl.BlockSpec((hp, fop), lambda s, r: (0, 0)),         # W2
            pl.BlockSpec((1, fop), lambda s, r: (0, 0)),          # b2
        ],
        out_specs=pl.BlockSpec((tile_n, fop), lambda s, r: (s, 0)),
        out_shape=jax.ShapeDtypeStruct((n_pad, fop), jnp.float32),
        scratch_shapes=[pltpu.VMEM((tile_n, fep), jnp.float32)],
        compiler_params=pltpu.CompilerParams(
            dimension_semantics=("parallel", "arbitrary"),
            vmem_limit_bytes=32 * 1024 * 1024),
        cost_estimate=pl.CostEstimate(flops=flops, transcendentals=0,
                                      bytes_accessed=bytes_accessed),
    )(dest_p, e_p, x_p, batch_p, u_p,
      w1x_p, w1e_p, w1u_p, b1_p, w2_p, b2_p)

    return out_p[:n, :f_out]


# ---------------------------------------------------------------------------
# Parameters (PyTorch-Linear-style uniform init) and pure-JAX reference
# ---------------------------------------------------------------------------

def init_params(key, f_x, f_e, f_u, hidden, f_x_out):
    f_in = f_e + f_x + f_u
    kw1, kb1, kw2, kb2 = jax.random.split(key, 4)
    b1_bound = 1.0 / float(f_in) ** 0.5
    b2_bound = 1.0 / float(hidden) ** 0.5
    return {
        "w1": jax.random.uniform(kw1, (f_in, hidden), jnp.float32, -b1_bound, b1_bound),
        "b1": jax.random.uniform(kb1, (hidden,), jnp.float32, -b1_bound, b1_bound),
        "w2": jax.random.uniform(kw2, (hidden, f_x_out), jnp.float32, -b2_bound, b2_bound),
        "b2": jax.random.uniform(kb2, (f_x_out,), jnp.float32, -b2_bound, b2_bound),
    }


def node_model_reference(params, x, edge_index, e, u, batch):
    """Pure-JAX reference mirroring the kernel's bf16 MXU operand rounding."""
    cd = lambda a: a.astype(COMPUTE_DTYPE).astype(jnp.float32)
    n, f_x = x.shape
    f_e = e.shape[1]
    dest = edge_index[1]
    w1, b1, w2, b2 = params["w1"], params["b1"], params["w2"], params["b2"]
    w1x, w1e, w1u = w1[:f_x], w1[f_x:f_x + f_e], w1[f_x + f_e:]
    e_agg = jax.ops.segment_sum(cd(e), dest, num_segments=n)       # scatter_add
    u_b = cd(u)[batch]
    h = cd(x) @ cd(w1x) + cd(e_agg) @ cd(w1e) + cd(u_b) @ cd(w1u) + b1
    h = jnp.maximum(h, 0.0)
    return cd(h) @ cd(w2) + b2


# ---------------------------------------------------------------------------
# Driver
# ---------------------------------------------------------------------------

if __name__ == "__main__":
    key = jax.random.PRNGKey(0)
    N, E, B = 12, 24, 2                 # nodes, edges, graphs
    F_X, F_E, F_U, H = 8, 8, 4, 32
    F_X_OUT = F_X                       # f_x_out=None -> f_x

    k_p, k_x, k_e, k_u, k_src, k_dst = jax.random.split(key, 6)
    params = init_params(k_p, F_X, F_E, F_U, H, F_X_OUT)

    x = jax.random.normal(k_x, (N, F_X), jnp.float32)
    e = jax.random.normal(k_e, (E, F_E), jnp.float32)
    u = jax.random.normal(k_u, (B, F_U), jnp.float32)
    batch = jnp.concatenate([jnp.zeros(N // 2, jnp.int32),
                             jnp.ones(N - N // 2, jnp.int32)])

    # edges stay within their own graph
    src0 = jax.random.randint(k_src, (E // 2,), 0, N // 2)
    dst0 = jax.random.randint(k_dst, (E // 2,), 0, N // 2)
    src1 = jax.random.randint(jax.random.fold_in(k_src, 1), (E // 2,), N // 2, N)
    dst1 = jax.random.randint(jax.random.fold_in(k_dst, 1), (E // 2,), N // 2, N)
    edge_index = jnp.stack([jnp.concatenate([src0, src1]),
                            jnp.concatenate([dst0, dst1])]).astype(jnp.int32)

    out = jax.jit(node_model_forward)(params, x, edge_index, e, u, batch)
    jax.block_until_ready(out)

    ref = node_model_reference(params, x, edge_index, e, u, batch)
    assert out.shape == (N, F_X_OUT)
    assert bool(jnp.all(jnp.isfinite(out)))
    max_err = float(jnp.max(jnp.abs(out - ref)))
    assert max_err < 5e-3, f"max |kernel - reference| = {max_err}"
    print("KERNEL_OK")
</pallas_src>

<mosaic_0001>
module attributes {stable_mosaic.version = 11 : i64} {
  func.func @_node_model_kernel(%arg0: i32, %arg1: i32, %arg2: memref<1x32xi32, #tpu.memory_space<vmem>>, %arg3: memref<32x128xbf16, #tpu.memory_space<vmem>>, %arg4: memref<16x128xbf16, #tpu.memory_space<vmem>>, %arg5: memref<16x1xi32, #tpu.memory_space<vmem>>, %arg6: memref<16x128xbf16, #tpu.memory_space<vmem>>, %arg7: memref<128x128xbf16, #tpu.memory_space<vmem>>, %arg8: memref<128x128xbf16, #tpu.memory_space<vmem>>, %arg9: memref<128x128xbf16, #tpu.memory_space<vmem>>, %arg10: memref<1x128xf32, #tpu.memory_space<vmem>>, %arg11: memref<128x128xbf16, #tpu.memory_space<vmem>>, %arg12: memref<1x128xf32, #tpu.memory_space<vmem>>, %arg13: memref<16x128xf32, #tpu.memory_space<vmem>>, %arg14: memref<16x128xf32, #tpu.memory_space<vmem>>) attributes {dimension_semantics = [#tpu.dimension_semantics<parallel>, #tpu.dimension_semantics<arbitrary>], iteration_bounds = array<i64: 1, 1>, scalar_prefetch = 0 : i64, scratch_operands = 1 : i64, tpu.core_type = #tpu.core_type<tc>, window_params = [{transform_indices = @transform_0, window_bounds = array<i64: 1, 32>}, {transform_indices = @transform_1, window_bounds = array<i64: 32, 128>}, {transform_indices = @transform_2, window_bounds = array<i64: 16, 128>}, {transform_indices = @transform_3, window_bounds = array<i64: 16, 1>}, {pipeline_mode = #tpu.pipeline_mode<synchronous>, transform_indices = @transform_4, window_bounds = array<i64: 16, 128>}, {pipeline_mode = #tpu.pipeline_mode<synchronous>, transform_indices = @transform_5, window_bounds = array<i64: 128, 128>}, {pipeline_mode = #tpu.pipeline_mode<synchronous>, transform_indices = @transform_6, window_bounds = array<i64: 128, 128>}, {pipeline_mode = #tpu.pipeline_mode<synchronous>, transform_indices = @transform_7, window_bounds = array<i64: 128, 128>}, {pipeline_mode = #tpu.pipeline_mode<synchronous>, transform_indices = @transform_8, window_bounds = array<i64: 1, 128>}, {pipeline_mode = #tpu.pipeline_mode<synchronous>, transform_indices = @transform_9, window_bounds = array<i64: 128, 128>}, {pipeline_mode = #tpu.pipeline_mode<synchronous>, transform_indices = @transform_10, window_bounds = array<i64: 1, 128>}, {transform_indices = @transform_11, window_bounds = array<i64: 16, 128>}]} {
    %c0_i32 = arith.constant 0 : i32
    %0 = arith.cmpi eq, %arg1, %c0_i32 : i32
    %1 = arith.extui %0 : i1 to i32
    %c0_i32_0 = arith.constant 0 : i32
    %2 = arith.cmpi ne, %1, %c0_i32_0 : i32
    scf.if %2 {
      %cst_10 = arith.constant 0.000000e+00 : f32
      %21 = vector.broadcast %cst_10 : f32 to vector<16x128xf32>
      %c0_11 = arith.constant 0 : index
      %c0_12 = arith.constant 0 : index
      %22 = vector.load %arg14[%c0_11, %c0_12] : memref<16x128xf32, #tpu.memory_space<vmem>>, vector<16x128xf32>
      tpu.vector_store %arg14[%c0_11, %c0_12], %21 {strides = array<i32>} : memref<16x128xf32, #tpu.memory_space<vmem>>, vector<16x128xf32>,
    } else {
    }
    %c16_i32 = arith.constant 16 : i32
    %3 = arith.muli %arg0, %c16_i32 : i32
    %4 = tpu.iota {dimensions = array<i32: 0>} : vector<16x32xi32>
    %5 = vector.broadcast %3 : i32 to vector<16x32xi32>
    %6 = arith.addi %5, %4 : vector<16x32xi32>
    %c0 = arith.constant 0 : index
    %c0_1 = arith.constant 0 : index
    %7 = vector.load %arg2[%c0, %c0_1] : memref<1x32xi32, #tpu.memory_space<vmem>>, vector<1x32xi32>
    %8 = vector.broadcast %7 : vector<1x32xi32> to vector<16x32xi32>
    %9 = arith.cmpi eq, %6, %8 : vector<16x32xi32>
    %10 = arith.extui %9 : vector<16x32xi1> to vector<16x32xi32>
    %11 = arith.sitofp %10 : vector<16x32xi32> to vector<16x32xf32>
    %12 = arith.truncf %11 : vector<16x32xf32> to vector<16x32xbf16>
    %c0_2 = arith.constant 0 : index
    %c0_3 = arith.constant 0 : index
    %13 = vector.load %arg14[%c0_2, %c0_3] : memref<16x128xf32, #tpu.memory_space<vmem>>, vector<16x128xf32>
    %c0_4 = arith.constant 0 : index
    %c0_5 = arith.constant 0 : index
    %14 = vector.load %arg3[%c0_4, %c0_5] : memref<32x128xbf16, #tpu.memory_space<vmem>>, vector<32x128xbf16>
    %cst = arith.constant dense<0.000000e+00> : vector<16x128xf32>
    %15 = tpu.matmul %12, %14, %cst {dimension_numbers = #tpu.dot_dimension_numbers<[1], [0], [0], [1], [0, 0, 1, 1], [], []>} : vector<16x32xbf16>, vector<32x128xbf16>, vector<16x128xf32> -> vector<16x128xf32>
    %16 = arith.addf %13, %15 : vector<16x128xf32>
    %c0_6 = arith.constant 0 : index
    %c0_7 = arith.constant 0 : index
    %17 = vector.load %arg14[%c0_6, %c0_7] : memref<16x128xf32, #tpu.memory_space<vmem>>, vector<16x128xf32>
    tpu.vector_store %arg14[%c0_6, %c0_7], %16 {strides = array<i32>} : memref<16x128xf32, #tpu.memory_space<vmem>>, vector<16x128xf32>,
    %c0_i32_8 = arith.constant 0 : i32
    %18 = arith.cmpi eq, %arg1, %c0_i32_8 : i32
    %19 = arith.extui %18 : i1 to i32
    %c0_i32_9 = arith.constant 0 : i32
    %20 = arith.cmpi ne, %19, %c0_i32_9 : i32
    scf.if %20 {
      %21 = tpu.iota {dimensions = array<i32: 1>} : vector<16x16xi32>
      %c0_10 = arith.constant 0 : index
      %c0_11 = arith.constant 0 : index
      %22 = vector.load %arg5[%c0_10, %c0_11] : memref<16x1xi32, #tpu.memory_space<vmem>>, vector<16x1xi32>
      %23 = vector.broadcast %22 : vector<16x1xi32> to vector<16x16xi32>
      %24 = arith.cmpi eq, %21, %23 : vector<16x16xi32>
      %25 = arith.extui %24 : vector<16x16xi1> to vector<16x16xi32>
      %26 = arith.sitofp %25 : vector<16x16xi32> to vector<16x16xf32>
      %27 = arith.truncf %26 : vector<16x16xf32> to vector<16x16xbf16>
      %c0_12 = arith.constant 0 : index
      %c0_13 = arith.constant 0 : index
      %28 = vector.load %arg6[%c0_12, %c0_13] : memref<16x128xbf16, #tpu.memory_space<vmem>>, vector<16x128xbf16>
      %cst_14 = arith.constant dense<0.000000e+00> : vector<16x128xf32>
      %29 = tpu.matmul %27, %28, %cst_14 {dimension_numbers = #tpu.dot_dimension_numbers<[1], [0], [0], [1], [0, 0, 1, 1], [], []>} : vector<16x16xbf16>, vector<16x128xbf16>, vector<16x128xf32> -> vector<16x128xf32>
      %c0_15 = arith.constant 0 : index
      %c0_16 = arith.constant 0 : index
      %30 = vector.load %arg4[%c0_15, %c0_16] : memref<16x128xbf16, #tpu.memory_space<vmem>>, vector<16x128xbf16>
      %c0_17 = arith.constant 0 : index
      %c0_18 = arith.constant 0 : index
      %31 = vector.load %arg7[%c0_17, %c0_18] : memref<128x128xbf16, #tpu.memory_space<vmem>>, vector<128x128xbf16>
      %cst_19 = arith.constant dense<0.000000e+00> : vector<16x128xf32>
      %32 = tpu.matmul %30, %31, %cst_19 {dimension_numbers = #tpu.dot_dimension_numbers<[1], [0], [0], [1], [0, 0, 1, 1], [], []>} : vector<16x128xbf16>, vector<128x128xbf16>, vector<16x128xf32> -> vector<16x128xf32>
      %c0_20 = arith.constant 0 : index
      %c0_21 = arith.constant 0 : index
      %33 = vector.load %arg14[%c0_20, %c0_21] : memref<16x128xf32, #tpu.memory_space<vmem>>, vector<16x128xf32>
      %34 = arith.truncf %33 : vector<16x128xf32> to vector<16x128xbf16>
      %c0_22 = arith.constant 0 : index
      %c0_23 = arith.constant 0 : index
      %35 = vector.load %arg8[%c0_22, %c0_23] : memref<128x128xbf16, #tpu.memory_space<vmem>>, vector<128x128xbf16>
      %cst_24 = arith.constant dense<0.000000e+00> : vector<16x128xf32>
      %36 = tpu.matmul %34, %35, %cst_24 {dimension_numbers = #tpu.dot_dimension_numbers<[1], [0], [0], [1], [0, 0, 1, 1], [], []>} : vector<16x128xbf16>, vector<128x128xbf16>, vector<16x128xf32> -> vector<16x128xf32>
      %37 = arith.addf %32, %36 : vector<16x128xf32>
      %38 = arith.truncf %29 : vector<16x128xf32> to vector<16x128xbf16>
      %c0_25 = arith.constant 0 : index
      %c0_26 = arith.constant 0 : index
      %39 = vector.load %arg9[%c0_25, %c0_26] : memref<128x128xbf16, #tpu.memory_space<vmem>>, vector<128x128xbf16>
      %cst_27 = arith.constant dense<0.000000e+00> : vector<16x128xf32>
      %40 = tpu.matmul %38, %39, %cst_27 {dimension_numbers = #tpu.dot_dimension_numbers<[1], [0], [0], [1], [0, 0, 1, 1], [], []>} : vector<16x128xbf16>, vector<128x128xbf16>, vector<16x128xf32> -> vector<16x128xf32>
      %41 = arith.addf %37, %40 : vector<16x128xf32>
      %c0_28 = arith.constant 0 : index
      %c0_29 = arith.constant 0 : index
      %42 = vector.load %arg10[%c0_28, %c0_29] : memref<1x128xf32, #tpu.memory_space<vmem>>, vector<1x128xf32>
      %43 = vector.broadcast %42 : vector<1x128xf32> to vector<16x128xf32>
      %44 = arith.addf %41, %43 : vector<16x128xf32>
      %cst_30 = arith.constant 0.000000e+00 : f32
      %45 = vector.broadcast %cst_30 : f32 to vector<16x128xf32>
      %46 = arith.maximumf %44, %45 : vector<16x128xf32>
      %47 = arith.truncf %46 : vector<16x128xf32> to vector<16x128xbf16>
      %c0_31 = arith.constant 0 : index
      %c0_32 = arith.constant 0 : index
      %48 = vector.load %arg11[%c0_31, %c0_32] : memref<128x128xbf16, #tpu.memory_space<vmem>>, vector<128x128xbf16>
      %cst_33 = arith.constant dense<0.000000e+00> : vector<16x128xf32>
      %49 = tpu.matmul %47, %48, %cst_33 {dimension_numbers = #tpu.dot_dimension_numbers<[1], [0], [0], [1], [0, 0, 1, 1], [], []>} : vector<16x128xbf16>, vector<128x128xbf16>, vector<16x128xf32> -> vector<16x128xf32>
      %c0_34 = arith.constant 0 : index
      %c0_35 = arith.constant 0 : index
      %50 = vector.load %arg12[%c0_34, %c0_35] : memref<1x128xf32, #tpu.memory_space<vmem>>, vector<1x128xf32>
      %51 = vector.broadcast %50 : vector<1x128xf32> to vector<16x128xf32>
      %52 = arith.addf %49, %51 : vector<16x128xf32>
      %c0_36 = arith.constant 0 : index
      %c0_37 = arith.constant 0 : index
      %53 = vector.load %arg13[%c0_36, %c0_37] : memref<16x128xf32, #tpu.memory_space<vmem>>, vector<16x128xf32>
      tpu.vector_store %arg13[%c0_36, %c0_37], %52 {strides = array<i32>} : memref<16x128xf32, #tpu.memory_space<vmem>>, vector<16x128xf32>,
    } else {
    }
    return
  }
  func.func @transform_0(%arg0: i32, %arg1: i32) -> (i32, i32) {
    %c0_i32 = arith.constant 0 : i32
    %c0_i32_0 = arith.constant 0 : i32
    return %c0_i32, %arg1 : i32, i32
  }
  func.func @transform_1(%arg0: i32, %arg1: i32) -> (i32, i32) {
    %c0_i32 = arith.constant 0 : i32
    %c0_i32_0 = arith.constant 0 : i32
    return %arg1, %c0_i32 : i32, i32
  }
  func.func @transform_2(%arg0: i32, %arg1: i32) -> (i32, i32) {
    %c0_i32 = arith.constant 0 : i32
    %c0_i32_0 = arith.constant 0 : i32
    return %arg0, %c0_i32 : i32, i32
  }
  func.func @transform_3(%arg0: i32, %arg1: i32) -> (i32, i32) {
    %c0_i32 = arith.constant 0 : i32
    %c0_i32_0 = arith.constant 0 : i32
    return %arg0, %c0_i32 : i32, i32
  }
  func.func @transform_4(%arg0: i32, %arg1: i32) -> (i32, i32) {
    %c0_i32 = arith.constant 0 : i32
    %c0_i32_0 = arith.constant 0 : i32
    %c0_i32_1 = arith.constant 0 : i32
    return %c0_i32, %c0_i32_0 : i32, i32
  }
  func.func @transform_5(%arg0: i32, %arg1: i32) -> (i32, i32) {
    %c0_i32 = arith.constant 0 : i32
    %c0_i32_0 = arith.constant 0 : i32
    %c0_i32_1 = arith.constant 0 : i32
    return %c0_i32, %c0_i32_0 : i32, i32
  }
  func.func @transform_6(%arg0: i32, %arg1: i32) -> (i32, i32) {
    %c0_i32 = arith.constant 0 : i32
    %c0_i32_0 = arith.constant 0 : i32
    %c0_i32_1 = arith.constant 0 : i32
    return %c0_i32, %c0_i32_0 : i32, i32
  }
  func.func @transform_7(%arg0: i32, %arg1: i32) -> (i32, i32) {
    %c0_i32 = arith.constant 0 : i32
    %c0_i32_0 = arith.constant 0 : i32
    %c0_i32_1 = arith.constant 0 : i32
    return %c0_i32, %c0_i32_0 : i32, i32
  }
  func.func @transform_8(%arg0: i32, %arg1: i32) -> (i32, i32) {
    %c0_i32 = arith.constant 0 : i32
    %c0_i32_0 = arith.constant 0 : i32
    %c0_i32_1 = arith.constant 0 : i32
    return %c0_i32, %c0_i32_0 : i32, i32
  }
  func.func @transform_9(%arg0: i32, %arg1: i32) -> (i32, i32) {
    %c0_i32 = arith.constant 0 : i32
    %c0_i32_0 = arith.constant 0 : i32
    %c0_i32_1 = arith.constant 0 : i32
    return %c0_i32, %c0_i32_0 : i32, i32
  }
  func.func @transform_10(%arg0: i32, %arg1: i32) -> (i32, i32) {
    %c0_i32 = arith.constant 0 : i32
    %c0_i32_0 = arith.constant 0 : i32
    %c0_i32_1 = arith.constant 0 : i32
    return %c0_i32, %c0_i32_0 : i32, i32
  }
  func.func @transform_11(%arg0: i32, %arg1: i32) -> (i32, i32) {
    %c0_i32 = arith.constant 0 : i32
    %c0_i32_0 = arith.constant 0 : i32
    return %arg0, %c0_i32 : i32, i32
  }
}

</mosaic_0001>

<llo_original>
// kernel: node_model_forward.1
$region0: #{node_model_forward.1}
  #allocation0 [shape = 'u32[]', space=smem, size = 0x4, offset = 0x4, fixed_abs, tag = 'smem constant byte address 0x4 - core index']
  #allocation1 [shape = 'u32[144,128]{1,0:T(1,128)}', space=vmem, size = 0x12000, scoped, tag = 'internal scratch']
  #allocation2 [shape = 'f32[16,128]{1,0:T(8,128)}', space=vmem, size = 0x2000, scoped, tag = 'scratch operand']
  %s0 = inlined_call_operand.vmem [shape: s32[1,32], index: 0, kind: input, shape index: {}]
  %s1 = inlined_call_operand.vmem [shape: bf16[32,128], index: 1, kind: input, shape index: {}]
  %s2 = inlined_call_operand.vmem [shape: bf16[16,128], index: 2, kind: input, shape index: {}]
  %s3 = inlined_call_operand.vmem [shape: s32[16,1], index: 3, kind: input, shape index: {}]
  %s4 = inlined_call_operand.vmem [shape: bf16[16,128], index: 4, kind: input, shape index: {}]
  %s5 = inlined_call_operand.vmem [shape: bf16[128,128], index: 5, kind: input, shape index: {}]
  %s6 = inlined_call_operand.vmem [shape: bf16[128,128], index: 6, kind: input, shape index: {}]
  %s7 = inlined_call_operand.vmem [shape: bf16[128,128], index: 7, kind: input, shape index: {}]
  %s8 = inlined_call_operand.vmem [shape: f32[1,128], index: 8, kind: input, shape index: {}]
  %s9 = inlined_call_operand.vmem [shape: bf16[128,128], index: 9, kind: input, shape index: {}]
  %s10 = inlined_call_operand.vmem [shape: f32[1,128], index: 10, kind: input, shape index: {}]
  %s11 = inlined_call_operand.vmem [shape: f32[16,128], index: 11, kind: output, shape index: {}]
  %s12 = sld [smem:[#allocation0]]
  $region62: #{node_model_forward.1} parent=0
    _
  %s14 = ssub.s32 1, %s12
  %s15 = scalar_select 0, %s14, %s12
  // Predicated region
  $region2: #{node_model_forward.1} parent=0 // pred_check
    _
  $region3: #{node_model_forward.1} parent=0 // pred_check_branch
    %17 = sbr.rel (0) target = $region5
  $region4: #{node_model_forward.1} parent=0 // pred_region
    _
  $region5: #{node_model_forward.1} parent=0 // pred_fallthru
    _
  // Predicated region
  $region6: #{node_model_forward.1} parent=0 // pred_check
    _
  $region7: #{node_model_forward.1} parent=0 // pred_check_branch
    %19 = sbr.rel (0) target = $region9
  $region8: #{node_model_forward.1} parent=0 // pred_region
    _
  $region9: #{node_model_forward.1} parent=0 // pred_fallthru
    _
  // Predicated region
  $region10: #{node_model_forward.1} parent=0 // pred_check
    _
  $region11: #{node_model_forward.1} parent=0 // pred_check_branch
    %21 = sbr.rel (0) target = $region13
  $region12: #{node_model_forward.1} parent=0 // pred_region
    _
  $region13: #{node_model_forward.1} parent=0 // pred_fallthru
    _
  // Predicated region
  $region14: #{node_model_forward.1} parent=0 // pred_check
    _
  $region15: #{node_model_forward.1} parent=0 // pred_check_branch
    %23 = sbr.rel (0) target = $region17
  $region16: #{node_model_forward.1} parent=0 // pred_region
    _
  $region17: #{node_model_forward.1} parent=0 // pred_fallthru
    _
  // Predicated region
  $region18: #{node_model_forward.1} parent=0 // pred_check
    _
  $region19: #{node_model_forward.1} parent=0 // pred_check_branch
    %25 = sbr.rel (0) target = $region21
  $region20: #{node_model_forward.1} parent=0 // pred_region
    _
  $region21: #{node_model_forward.1} parent=0 // pred_fallthru
    _
  // Predicated region
  $region22: #{node_model_forward.1} parent=0 // pred_check
    _
  $region23: #{node_model_forward.1} parent=0 // pred_check_branch
    %27 = sbr.rel (0) target = $region25
  $region24: #{node_model_forward.1} parent=0 // pred_region
    _
  $region25: #{node_model_forward.1} parent=0 // pred_fallthru
    _
  // Predicated region
  $region26: #{node_model_forward.1} parent=0 // pred_check
    _
  $region27: #{node_model_forward.1} parent=0 // pred_check_branch
    %29 = sbr.rel (0) target = $region29
  $region28: #{node_model_forward.1} parent=0 // pred_region
    _
  $region29: #{node_model_forward.1} parent=0 // pred_fallthru
    _
  // Predicated region
  $region30: #{node_model_forward.1} parent=0 // pred_check
    _
  $region31: #{node_model_forward.1} parent=0 // pred_check_branch
    %31 = sbr.rel (0) target = $region33
  $region32: #{node_model_forward.1} parent=0 // pred_region
    _
  $region33: #{node_model_forward.1} parent=0 // pred_fallthru
    _
  // Predicated region
  $region34: #{node_model_forward.1} parent=0 // pred_check
    _
  $region35: #{node_model_forward.1} parent=0 // pred_check_branch
    %33 = sbr.rel (0) target = $region37
  $region36: #{node_model_forward.1} parent=0 // pred_region
    _
  $region37: #{node_model_forward.1} parent=0 // pred_fallthru
    _
  // Predicated region
  $region38: #{node_model_forward.1} parent=0 // pred_check
    _
  $region39: #{node_model_forward.1} parent=0 // pred_check_branch
    %35 = sbr.rel (0) target = $region41
  $region40: #{node_model_forward.1} parent=0 // pred_region
    _
  $region41: #{node_model_forward.1} parent=0 // pred_fallthru
    _
  // Predicated region
  $region42: #{node_model_forward.1} parent=0 // pred_check
    _
  $region43: #{node_model_forward.1} parent=0 // pred_check_branch
    %37 = sbr.rel (0) target = $region45
  $region44: #{node_model_forward.1} parent=0 // pred_region
    _
  $region45: #{node_model_forward.1} parent=0 // pred_fallthru
    _
  %p39 = scmp.eq.s32.totalorder 0, 0
  // Predicated region
  $region46: #{node_model_forward.1} parent=0 // pred_check
    %p40 = pneg %p39
  $region47: #{node_model_forward.1} parent=0 // pred_check_branch
    %42 = sbr.rel (%p40) target = $region49
  $region48: #{node_model_forward.1} parent=0 // pred_region
    %43 = vst [vmem:[#allocation2] sm:$0xff] 0.0
    %44 = vst [vmem:[#allocation2 + $0x8] sm:$0xff] 0.0
  $region49: #{node_model_forward.1} parent=0 // pred_fallthru
    _
  %s45 = smul.u32 0, 16
  %v46 = vlaneseq
  %v47 = vshrl.u32 %v46, 7
  %v48 = vadd.s32 %v47, 8
  %v49 = vstv %s45
  %v50 = vadd.s32 %v49, %v47
  %v51 = vadd.s32 %v49, %v48
  %v52 = vld [vmem:[%s0] sm:$0x1]
  %v53 = vlaneseq
  %v54 = vshrl.u32 %v53, 7
  %v55 = vsub.s32 0, %v54
  %v56 = vrot.slane %v52, %v55
  %vm57 = vcmp.eq.s32.totalorder %v50, %v56
  %vm58 = vcmp.eq.s32.totalorder %v51, %v56
  %v59 = vsel %vm57, 1, 0
  %v60 = vsel %vm58, 1, 0
  %v61 = vcvt.s32.f32 %v59
  %v62 = vcvt.s32.f32 %v60
  %v63 = vpack.c.bf16 %v62, %v61
  %v64 = vld [vmem:[#allocation2] sm:$0xff]
  %v65 = vld [vmem:[#allocation2 + $0x8] sm:$0xff]
  %v66 = vld [vmem:[%s1] sm:$0xf]
  %v67 = vld [vmem:[%s1 + $0x4] sm:$0xf]
  %v68 = vld [vmem:[%s1 + $0x8] sm:$0xf]
  %v69 = vld [vmem:[%s1 + $0xc] sm:$0xf]
  %v74 = vunpack.c.l.b16 %v66
  %v75 = vunpack.c.l.b16 %v67
  %v76 = vunpack.c.l.b16 %v68
  %v77 = vunpack.c.l.b16 %v69
  %v78 = vpack.c.b16 %v75, %v74
  %v79 = vpack.c.b16 %v77, %v76
  %vm82 = vcmask 261120
  %v84 = vsel %vm82, %v63, 0
  %86 = vmatprep.subr.bf16.mxu0 0
  %87 = vmatpush1.bf16.msra.mxu0 %v78
  %88 = vmatprep.subr.bf16.mxu0 0
  %89 = vmatpush1.bf16.msra.mxu0 %v79
  %90 = vmatprep.subr.bf16.mxu0 0
  %91 = vmatpush1.bf16.msra.mxu0 0
  %92 = vmatprep.subr.bf16.mxu0 0
  %93 = vmatpush1.bf16.msra.mxu0 0
  %94 = vmatprep.subr.bf16.mxu0 0
  %95 = vmatpush1.bf16.msra.mxu0 0
  %96 = vmatprep.subr.bf16.mxu0 0
  %97 = vmatpush1.bf16.msra.mxu0 0
  %98 = vmatprep.subr.bf16.mxu0 0
  %99 = vmatpush1.bf16.msra.mxu0 0
  %100 = vmatprep.subr.bf16.mxu0 0
  %101 = vmatpush1.bf16.msra.mxu0 0
  %102 = vmatprep.subr.bf16.mxu0 0
  %103 = vmatpush1.bf16.msra.mxu0 0
  %104 = vmatprep.subr.bf16.mxu0 0
  %105 = vmatpush1.bf16.msra.mxu0 0
  %106 = vmatprep.subr.bf16.mxu0 0
  %107 = vmatpush1.bf16.msra.mxu0 0
  %108 = vmatprep.subr.bf16.mxu0 0
  %109 = vmatpush1.bf16.msra.mxu0 0
  %110 = vmatprep.subr.bf16.mxu0 0
  %111 = vmatpush1.bf16.msra.mxu0 0
  %112 = vmatprep.subr.bf16.mxu0 0
  %113 = vmatpush1.bf16.msra.mxu0 0
  %114 = vmatprep.subr.bf16.mxu0 0
  %115 = vmatpush1.bf16.msra.mxu0 0
  %116 = vmatprep.subr.bf16.mxu0 0
  %117 = vmatpush1.bf16.msra.mxu0 0
  %118 = vmatprep.mubr.bf16.mxu0 0
  %119 = vmatmul.mubr.bf16.gmra.mrb[0].mxu0 %v84
  %v120 = vpop.f32.mrb[0].mxu0
  %v121 = vadd.f32 0.0, %v120
  %v122 = vpop.f32.mrb[0].mxu0
  %v123 = vpop.f32.mrb[0].mxu0
  %v124 = vadd.f32 0.0, %v123
  %v125 = vpop.f32.mrb[0].mxu0
  %126 = vdwg.mxu0
  %v127 = vadd.f32 %v64, %v121
  %v128 = vadd.f32 %v65, %v124
  %129 = vst [vmem:[#allocation2] sm:$0xff] %v127
  %130 = vst [vmem:[#allocation2 + $0x8] sm:$0xff] %v128
  // Predicated region
  $region50: #{node_model_forward.1} parent=0 // pred_check
    %p131 = pneg %p39
  $region51: #{node_model_forward.1} parent=0 // pred_check_branch
    %133 = sbr.rel (%p131) target = $region53
  $region52: #{node_model_forward.1} parent=0 // pred_region
    %v134 = vlaneseq
    %v135 = vand.u32 %v134, 127
    %v136 = vld [vmem:[%s3] sm:$0xff]
    %v137 = vld [vmem:[%s3 + $0x8] sm:$0xff]
    %138 = vset.pattern.permute.xlu0 0
    %139 = vperm.xlu0 %138, %v136
    %v140 = vpop.permute.xlu0 %139
    %141 = vset.pattern.permute.xlu0 0
    %142 = vperm.xlu0 %141, %v137
    %v143 = vpop.permute.xlu0 %142
    %vm144 = vcmp.eq.s32.totalorder %v135, %v140
    %vm145 = vcmp.eq.s32.totalorder %v135, %v143
    %v146 = vsel %vm144, 1, 0
    %v147 = vsel %vm145, 1, 0
    %v148 = vcvt.s32.f32 %v146
    %v149 = vcvt.s32.f32 %v147
    %v150 = vpack.c.bf16 %v149, %v148
    %v151 = vld [vmem:[%s4] sm:$0xf]
    %v152 = vld [vmem:[%s4 + $0x4] sm:$0xf]
    %v155 = vunpack.c.l.b16 %v151
    %v156 = vunpack.c.l.b16 %v152
    %v157 = vpack.c.b16 %v156, %v155
    %vm159 = vcmask 130048
    %v161 = vsel %vm159, %v150, 0
    %163 = vmatprep.subr.bf16.mxu0 0
    %164 = vmatpush1.bf16.msra.mxu0 %v157
    %165 = vmatprep.subr.bf16.mxu0 0
    %166 = vmatpush1.bf16.msra.mxu0 0
    %167 = vmatprep.subr.bf16.mxu0 0
    %168 = vmatpush1.bf16.msra.mxu0 0
    %169 = vmatprep.subr.bf16.mxu0 0
    %170 = vmatpush1.bf16.msra.mxu0 0
    %171 = vmatprep.subr.bf16.mxu0 0
    %172 = vmatpush1.bf16.msra.mxu0 0
    %173 = vmatprep.subr.bf16.mxu0 0
    %174 = vmatpush1.bf16.msra.mxu0 0
    %175 = vmatprep.subr.bf16.mxu0 0
    %176 = vmatpush1.bf16.msra.mxu0 0
    %177 = vmatprep.subr.bf16.mxu0 0
    %178 = vmatpush1.bf16.msra.mxu0 0
    %179 = vmatprep.subr.bf16.mxu0 0
    %180 = vmatpush1.bf16.msra.mxu0 0
    %181 = vmatprep.subr.bf16.mxu0 0
    %182 = vmatpush1.bf16.msra.mxu0 0
    %183 = vmatprep.subr.bf16.mxu0 0
    %184 = vmatpush1.bf16.msra.mxu0 0
    %185 = vmatprep.subr.bf16.mxu0 0
    %186 = vmatpush1.bf16.msra.mxu0 0
    %187 = vmatprep.subr.bf16.mxu0 0
    %188 = vmatpush1.bf16.msra.mxu0 0
    %189 = vmatprep.subr.bf16.mxu0 0
    %190 = vmatpush1.bf16.msra.mxu0 0
    %191 = vmatprep.subr.bf16.mxu0 0
    %192 = vmatpush1.bf16.msra.mxu0 0
    %193 = vmatprep.subr.bf16.mxu0 0
    %194 = vmatpush1.bf16.msra.mxu0 0
    %195 = vmatprep.mubr.bf16.mxu0 0
    %196 = vmatmul.mubr.bf16.gmra.mrb[0].mxu0 %v161
    %v197 = vpop.f32.mrb[0].mxu0
    %v198 = vadd.f32 0.0, %v197
    %v199 = vpop.f32.mrb[0].mxu0
    %v200 = vpop.f32.mrb[0].mxu0
    %v201 = vadd.f32 0.0, %v200
    %v202 = vpop.f32.mrb[0].mxu0
    %203 = vdwg.mxu0
    %v204 = vld [vmem:[%s2] sm:$0xf]
    %v205 = vld [vmem:[%s2 + $0x4] sm:$0xf]
    %v206 = vld [vmem:[%s5] sm:$0xf]
    %v207 = vld [vmem:[%s5 + $0x4] sm:$0xf]
    %v208 = vld [vmem:[%s5 + $0x8] sm:$0xf]
    %v209 = vld [vmem:[%s5 + $0xc] sm:$0xf]
    %v210 = vld [vmem:[%s5 + $0x10] sm:$0xf]
    %v211 = vld [vmem:[%s5 + $0x14] sm:$0xf]
    %v212 = vld [vmem:[%s5 + $0x18] sm:$0xf]
    %v213 = vld [vmem:[%s5 + $0x1c] sm:$0xf]
    %v214 = vld [vmem:[%s5 + $0x20] sm:$0xf]
    %v215 = vld [vmem:[%s5 + $0x24] sm:$0xf]
    %v216 = vld [vmem:[%s5 + $0x28] sm:$0xf]
    %v217 = vld [vmem:[%s5 + $0x2c] sm:$0xf]
    %v218 = vld [vmem:[%s5 + $0x30] sm:$0xf]
    %v219 = vld [vmem:[%s5 + $0x34] sm:$0xf]
    %v220 = vld [vmem:[%s5 + $0x38] sm:$0xf]
    %v221 = vld [vmem:[%s5 + $0x3c] sm:$0xf]
    %v222 = vld [vmem:[#allocation2] sm:$0xff]
    %v223 = vld [vmem:[#allocation2 + $0x8] sm:$0xff]
    %v224 = vpack.c.bf16 %v223, %v222
    %v225 = vld [vmem:[%s6] sm:$0xf]
    %v226 = vld [vmem:[%s6 + $0x4] sm:$0xf]
    %v227 = vld [vmem:[%s6 + $0x8] sm:$0xf]
    %v228 = vld [vmem:[%s6 + $0xc] sm:$0xf]
    %v229 = vld [vmem:[%s6 + $0x10] sm:$0xf]
    %v230 = vld [vmem:[%s6 + $0x14] sm:$0xf]
    %v231 = vld [vmem:[%s6 + $0x18] sm:$0xf]
    %v232 = vld [vmem:[%s6 + $0x1c] sm:$0xf]
    %v233 = vld [vmem:[%s6 + $0x20] sm:$0xf]
    %v234 = vld [vmem:[%s6 + $0x24] sm:$0xf]
    %v235 = vld [vmem:[%s6 + $0x28] sm:$0xf]
    %v236 = vld [vmem:[%s6 + $0x2c] sm:$0xf]
    %v237 = vld [vmem:[%s6 + $0x30] sm:$0xf]
    %v238 = vld [vmem:[%s6 + $0x34] sm:$0xf]
    %v239 = vld [vmem:[%s6 + $0x38] sm:$0xf]
    %v240 = vld [vmem:[%s6 + $0x3c] sm:$0xf]
    %v257 = vunpack.c.l.b16 %v225
    %v258 = vunpack.c.l.b16 %v226
    %v259 = vunpack.c.l.b16 %v227
    %v260 = vunpack.c.l.b16 %v228
    %v261 = vunpack.c.l.b16 %v229
    %v262 = vunpack.c.l.b16 %v230
    %v263 = vunpack.c.l.b16 %v231
    %v264 = vunpack.c.l.b16 %v232
    %v265 = vunpack.c.l.b16 %v233
    %v266 = vunpack.c.l.b16 %v234
    %v267 = vunpack.c.l.b16 %v235
    %v268 = vunpack.c.l.b16 %v236
    %v269 = vunpack.c.l.b16 %v237
    %v270 = vunpack.c.l.b16 %v238
    %v271 = vunpack.c.l.b16 %v239
    %v272 = vunpack.c.l.b16 %v240
    %v273 = vpack.c.b16 %v258, %v257
    %v274 = vpack.c.b16 %v260, %v259
    %v275 = vpack.c.b16 %v262, %v261
    %v276 = vpack.c.b16 %v264, %v263
    %v277 = vpack.c.b16 %v266, %v265
    %v278 = vpack.c.b16 %v268, %v267
    %v279 = vpack.c.b16 %v270, %v269
    %v280 = vpack.c.b16 %v272, %v271
    %289 = vmatprep.subr.bf16.mxu0 0
    %290 = vmatpush1.bf16.msra.mxu0 %v273
    %291 = vmatprep.subr.bf16.mxu0 0
    %292 = vmatpush1.bf16.msra.mxu0 %v274
    %293 = vmatprep.subr.bf16.mxu0 0
    %294 = vmatpush1.bf16.msra.mxu0 %v275
    %295 = vmatprep.subr.bf16.mxu0 0
    %296 = vmatpush1.bf16.msra.mxu0 %v276
    %297 = vmatprep.subr.bf16.mxu0 0
    %298 = vmatpush1.bf16.msra.mxu0 %v277
    %299 = vmatprep.subr.bf16.mxu0 0
    %300 = vmatpush1.bf16.msra.mxu0 %v278
    %301 = vmatprep.subr.bf16.mxu0 0
    %302 = vmatpush1.bf16.msra.mxu0 %v279
    %303 = vmatprep.subr.bf16.mxu0 0
    %304 = vmatpush1.bf16.msra.mxu0 %v280
    %305 = vmatprep.subr.bf16.mxu0 0
    %306 = vmatpush1.bf16.msra.mxu0 0
    %307 = vmatprep.subr.bf16.mxu0 0
    %308 = vmatpush1.bf16.msra.mxu0 0
    %309 = vmatprep.subr.bf16.mxu0 0
    %310 = vmatpush1.bf16.msra.mxu0 0
    %311 = vmatprep.subr.bf16.mxu0 0
    %312 = vmatpush1.bf16.msra.mxu0 0
    %313 = vmatprep.subr.bf16.mxu0 0
    %314 = vmatpush1.bf16.msra.mxu0 0
    %315 = vmatprep.subr.bf16.mxu0 0
    %316 = vmatpush1.bf16.msra.mxu0 0
    %317 = vmatprep.subr.bf16.mxu0 0
    %318 = vmatpush1.bf16.msra.mxu0 0
    %319 = vmatprep.subr.bf16.mxu0 0
    %320 = vmatpush1.bf16.msra.mxu0 0
    %321 = vmatprep.mubr.bf16.mxu0 0
    %322 = vmatmul.mubr.bf16.gmra.mrb[0].mxu0 %v224
    %v323 = vpop.f32.mrb[0].mxu0
    %v324 = vadd.f32 0.0, %v323
    %v325 = vpop.f32.mrb[0].mxu0
    %v326 = vpop.f32.mrb[0].mxu0
    %v327 = vadd.f32 0.0, %v326
    %v328 = vpop.f32.mrb[0].mxu0
    %329 = vdwg.mxu0
    %v332 = vunpack.c.l.b16 %v204
    %v333 = vunpack.c.l.b16 %v205
    %v334 = vpack.c.b16 %v333, %v332
    %v352 = vunpack.c.l.b16 %v206
    %v353 = vunpack.c.l.b16 %v207
    %v354 = vunpack.c.l.b16 %v208
    %v355 = vunpack.c.l.b16 %v209
    %v356 = vunpack.c.l.b16 %v210
    %v357 = vunpack.c.l.b16 %v211
    %v358 = vunpack.c.l.b16 %v212
    %v359 = vunpack.c.l.b16 %v213
    %v360 = vunpack.c.l.b16 %v214
    %v361 = vunpack.c.l.b16 %v215
    %v362 = vunpack.c.l.b16 %v216
    %v363 = vunpack.c.l.b16 %v217
    %v364 = vunpack.c.l.b16 %v218
    %v365 = vunpack.c.l.b16 %v219
    %v366 = vunpack.c.l.b16 %v220
    %v367 = vunpack.c.l.b16 %v221
    %v368 = vpack.c.b16 %v353, %v352
    %v369 = vpack.c.b16 %v355, %v354
    %v370 = vpack.c.b16 %v357, %v356
    %v371 = vpack.c.b16 %v359, %v358
    %v372 = vpack.c.b16 %v361, %v360
    %v373 = vpack.c.b16 %v363, %v362
    %v374 = vpack.c.b16 %v365, %v364
    %v375 = vpack.c.b16 %v367, %v366
    %384 = vmatprep.subr.bf16.mxu0 0
    %385 = vmatpush1.bf16.msra.mxu0 %v368
    %386 = vmatprep.subr.bf16.mxu0 0
    %387 = vmatpush1.bf16.msra.mxu0 %v369
    %388 = vmatprep.subr.bf16.mxu0 0
    %389 = vmatpush1.bf16.msra.mxu0 %v370
    %390 = vmatprep.subr.bf16.mxu0 0
    %391 = vmatpush1.bf16.msra.mxu0 %v371
    %392 = vmatprep.subr.bf16.mxu0 0
    %393 = vmatpush1.bf16.msra.mxu0 %v372
    %394 = vmatprep.subr.bf16.mxu0 0
    %395 = vmatpush1.bf16.msra.mxu0 %v373
    %396 = vmatprep.subr.bf16.mxu0 0
    %397 = vmatpush1.bf16.msra.mxu0 %v374
    %398 = vmatprep.subr.bf16.mxu0 0
    %399 = vmatpush1.bf16.msra.mxu0 %v375
    %400 = vmatprep.subr.bf16.mxu0 0
    %401 = vmatpush1.bf16.msra.mxu0 0
    %402 = vmatprep.subr.bf16.mxu0 0
    %403 = vmatpush1.bf16.msra.mxu0 0
    %404 = vmatprep.subr.bf16.mxu0 0
    %405 = vmatpush1.bf16.msra.mxu0 0
    %406 = vmatprep.subr.bf16.mxu0 0
    %407 = vmatpush1.bf16.msra.mxu0 0
    %408 = vmatprep.subr.bf16.mxu0 0
    %409 = vmatpush1.bf16.msra.mxu0 0
    %410 = vmatprep.subr.bf16.mxu0 0
    %411 = vmatpush1.bf16.msra.mxu0 0
    %412 = vmatprep.subr.bf16.mxu0 0
    %413 = vmatpush1.bf16.msra.mxu0 0
    %414 = vmatprep.subr.bf16.mxu0 0
    %415 = vmatpush1.bf16.msra.mxu0 0
    %416 = vmatprep.mubr.bf16.mxu0 0
    %417 = vmatmul.mubr.bf16.gmra.mrb[0].mxu0 %v334
    %v418 = vpop.f32.mrb[0].mxu0
    %v419 = vadd.f32 %v324, %v418
    %v420 = vpop.f32.mrb[0].mxu0
    %v421 = vpop.f32.mrb[0].mxu0
    %v422 = vadd.f32 %v327, %v421
    %v423 = vpop.f32.mrb[0].mxu0
    %424 = vdwg.mxu0
    %v425 = vpack.c.bf16 %v201, %v198
    %v426 = vld [vmem:[%s7] sm:$0xf]
    %v427 = vld [vmem:[%s7 + $0x4] sm:$0xf]
    %v428 = vld [vmem:[%s7 + $0x8] sm:$0xf]
    %v429 = vld [vmem:[%s7 + $0xc] sm:$0xf]
    %v430 = vld [vmem:[%s7 + $0x10] sm:$0xf]
    %v431 = vld [vmem:[%s7 + $0x14] sm:$0xf]
    %v432 = vld [vmem:[%s7 + $0x18] sm:$0xf]
    %v433 = vld [vmem:[%s7 + $0x1c] sm:$0xf]
    %v434 = vld [vmem:[%s7 + $0x20] sm:$0xf]
    %v435 = vld [vmem:[%s7 + $0x24] sm:$0xf]
    %v436 = vld [vmem:[%s7 + $0x28] sm:$0xf]
    %v437 = vld [vmem:[%s7 + $0x2c] sm:$0xf]
    %v438 = vld [vmem:[%s7 + $0x30] sm:$0xf]
    %v439 = vld [vmem:[%s7 + $0x34] sm:$0xf]
    %v440 = vld [vmem:[%s7 + $0x38] sm:$0xf]
    %v441 = vld [vmem:[%s7 + $0x3c] sm:$0xf]
    %v458 = vunpack.c.l.b16 %v426
    %v459 = vunpack.c.l.b16 %v427
    %v460 = vunpack.c.l.b16 %v428
    %v461 = vunpack.c.l.b16 %v429
    %v462 = vunpack.c.l.b16 %v430
    %v463 = vunpack.c.l.b16 %v431
    %v464 = vunpack.c.l.b16 %v432
    %v465 = vunpack.c.l.b16 %v433
    %v466 = vunpack.c.l.b16 %v434
    %v467 = vunpack.c.l.b16 %v435
    %v468 = vunpack.c.l.b16 %v436
    %v469 = vunpack.c.l.b16 %v437
    %v470 = vunpack.c.l.b16 %v438
    %v471 = vunpack.c.l.b16 %v439
    %v472 = vunpack.c.l.b16 %v440
    %v473 = vunpack.c.l.b16 %v441
    %v474 = vpack.c.b16 %v459, %v458
    %v475 = vpack.c.b16 %v461, %v460
    %v476 = vpack.c.b16 %v463, %v462
    %v477 = vpack.c.b16 %v465, %v464
    %v478 = vpack.c.b16 %v467, %v466
    %v479 = vpack.c.b16 %v469, %v468
    %v480 = vpack.c.b16 %v471, %v470
    %v481 = vpack.c.b16 %v473, %v472
    %490 = vmatprep.subr.bf16.mxu0 0
    %491 = vmatpush1.bf16.msra.mxu0 %v474
    %492 = vmatprep.subr.bf16.mxu0 0
    %493 = vmatpush1.bf16.msra.mxu0 %v475
    %494 = vmatprep.subr.bf16.mxu0 0
    %495 = vmatpush1.bf16.msra.mxu0 %v476
    %496 = vmatprep.subr.bf16.mxu0 0
    %497 = vmatpush1.bf16.msra.mxu0 %v477
    %498 = vmatprep.subr.bf16.mxu0 0
    %499 = vmatpush1.bf16.msra.mxu0 %v478
    %500 = vmatprep.subr.bf16.mxu0 0
    %501 = vmatpush1.bf16.msra.mxu0 %v479
    %502 = vmatprep.subr.bf16.mxu0 0
    %503 = vmatpush1.bf16.msra.mxu0 %v480
    %504 = vmatprep.subr.bf16.mxu0 0
    %505 = vmatpush1.bf16.msra.mxu0 %v481
    %506 = vmatprep.subr.bf16.mxu0 0
    %507 = vmatpush1.bf16.msra.mxu0 0
    %508 = vmatprep.subr.bf16.mxu0 0
    %509 = vmatpush1.bf16.msra.mxu0 0
    %510 = vmatprep.subr.bf16.mxu0 0
    %511 = vmatpush1.bf16.msra.mxu0 0
    %512 = vmatprep.subr.bf16.mxu0 0
    %513 = vmatpush1.bf16.msra.mxu0 0
    %514 = vmatprep.subr.bf16.mxu0 0
    %515 = vmatpush1.bf16.msra.mxu0 0
    %516 = vmatprep.subr.bf16.mxu0 0
    %517 = vmatpush1.bf16.msra.mxu0 0
    %518 = vmatprep.subr.bf16.mxu0 0
    %519 = vmatpush1.bf16.msra.mxu0 0
    %520 = vmatprep.subr.bf16.mxu0 0
    %521 = vmatpush1.bf16.msra.mxu0 0
    %522 = vmatprep.mubr.bf16.mxu0 0
    %523 = vmatmul.mubr.bf16.gmra.mrb[0].mxu0 %v425
    %v524 = vpop.f32.mrb[0].mxu0
    %v525 = vadd.f32 0.0, %v524
    %v526 = vpop.f32.mrb[0].mxu0
    %v527 = vpop.f32.mrb[0].mxu0
    %v528 = vadd.f32 0.0, %v527
    %v529 = vpop.f32.mrb[0].mxu0
    %530 = vdwg.mxu0
    %v531 = vadd.f32 %v419, %v525
    %v532 = vadd.f32 %v422, %v528
    %v533 = vld [vmem:[%s8] sm:$0x1]
    %v535 = vlaneseq
    %v536 = vshrl.u32 %v535, 7
    %v537 = vsub.s32 0, %v536
    %v538 = vrot.slane %v533, %v537
    %v540 = vadd.f32 %v531, %v538
    %v541 = vadd.f32 %v532, %v538
    %v542 = vmax.f32 %v540, 0.0
    %v543 = vmax.f32 %v541, 0.0
    %v544 = vpack.c.bf16 %v543, %v542
    %v545 = vld [vmem:[%s9] sm:$0xf]
    %v546 = vld [vmem:[%s9 + $0x4] sm:$0xf]
    %v547 = vld [vmem:[%s9 + $0x8] sm:$0xf]
    %v548 = vld [vmem:[%s9 + $0xc] sm:$0xf]
    %v549 = vld [vmem:[%s9 + $0x10] sm:$0xf]
    %v550 = vld [vmem:[%s9 + $0x14] sm:$0xf]
    %v551 = vld [vmem:[%s9 + $0x18] sm:$0xf]
    %v552 = vld [vmem:[%s9 + $0x1c] sm:$0xf]
    %v553 = vld [vmem:[%s9 + $0x20] sm:$0xf]
    %v554 = vld [vmem:[%s9 + $0x24] sm:$0xf]
    %v555 = vld [vmem:[%s9 + $0x28] sm:$0xf]
    %v556 = vld [vmem:[%s9 + $0x2c] sm:$0xf]
    %v557 = vld [vmem:[%s9 + $0x30] sm:$0xf]
    %v558 = vld [vmem:[%s9 + $0x34] sm:$0xf]
    %v559 = vld [vmem:[%s9 + $0x38] sm:$0xf]
    %v560 = vld [vmem:[%s9 + $0x3c] sm:$0xf]
    %v561 = vld [vmem:[%s10] sm:$0x1]
    %v563 = vlaneseq
    %v564 = vshrl.u32 %v563, 7
    %v565 = vsub.s32 0, %v564
    %v566 = vrot.slane %v561, %v565
    %v584 = vunpack.c.l.b16 %v545
    %v585 = vunpack.c.l.b16 %v546
    %v586 = vunpack.c.l.b16 %v547
    %v587 = vunpack.c.l.b16 %v548
    %v588 = vunpack.c.l.b16 %v549
    %v589 = vunpack.c.l.b16 %v550
    %v590 = vunpack.c.l.b16 %v551
    %v591 = vunpack.c.l.b16 %v552
    %v592 = vunpack.c.l.b16 %v553
    %v593 = vunpack.c.l.b16 %v554
    %v594 = vunpack.c.l.b16 %v555
    %v595 = vunpack.c.l.b16 %v556
    %v596 = vunpack.c.l.b16 %v557
    %v597 = vunpack.c.l.b16 %v558
    %v598 = vunpack.c.l.b16 %v559
    %v599 = vunpack.c.l.b16 %v560
    %v600 = vpack.c.b16 %v585, %v584
    %v601 = vpack.c.b16 %v587, %v586
    %v602 = vpack.c.b16 %v589, %v588
    %v603 = vpack.c.b16 %v591, %v590
    %v604 = vpack.c.b16 %v593, %v592
    %v605 = vpack.c.b16 %v595, %v594
    %v606 = vpack.c.b16 %v597, %v596
    %v607 = vpack.c.b16 %v599, %v598
    %616 = vmatprep.subr.bf16.mxu0 0
    %617 = vmatpush1.bf16.msra.mxu0 %v600
    %618 = vmatprep.subr.bf16.mxu0 0
    %619 = vmatpush1.bf16.msra.mxu0 %v601
    %620 = vmatprep.subr.bf16.mxu0 0
    %621 = vmatpush1.bf16.msra.mxu0 %v602
    %622 = vmatprep.subr.bf16.mxu0 0
    %623 = vmatpush1.bf16.msra.mxu0 %v603
    %624 = vmatprep.subr.bf16.mxu0 0
    %625 = vmatpush1.bf16.msra.mxu0 %v604
    %626 = vmatprep.subr.bf16.mxu0 0
    %627 = vmatpush1.bf16.msra.mxu0 %v605
    %628 = vmatprep.subr.bf16.mxu0 0
    %629 = vmatpush1.bf16.msra.mxu0 %v606
    %630 = vmatprep.subr.bf16.mxu0 0
    %631 = vmatpush1.bf16.msra.mxu0 %v607
    %632 = vmatprep.subr.bf16.mxu0 0
    %633 = vmatpush1.bf16.msra.mxu0 0
    %634 = vmatprep.subr.bf16.mxu0 0
    %635 = vmatpush1.bf16.msra.mxu0 0
    %636 = vmatprep.subr.bf16.mxu0 0
    %637 = vmatpush1.bf16.msra.mxu0 0
    %638 = vmatprep.subr.bf16.mxu0 0
    %639 = vmatpush1.bf16.msra.mxu0 0
    %640 = vmatprep.subr.bf16.mxu0 0
    %641 = vmatpush1.bf16.msra.mxu0 0
    %642 = vmatprep.subr.bf16.mxu0 0
    %643 = vmatpush1.bf16.msra.mxu0 0
    %644 = vmatprep.subr.bf16.mxu0 0
    %645 = vmatpush1.bf16.msra.mxu0 0
    %646 = vmatprep.subr.bf16.mxu0 0
    %647 = vmatpush1.bf16.msra.mxu0 0
    %648 = vmatprep.mubr.bf16.mxu0 0
    %649 = vmatmul.mubr.bf16.gmra.mrb[0].mxu0 %v544
    %v650 = vpop.f32.mrb[0].mxu0
    %v651 = vadd.f32 %v566, %v650
    %v652 = vpop.f32.mrb[0].mxu0
    %v653 = vpop.f32.mrb[0].mxu0
    %v654 = vadd.f32 %v566, %v653
    %v655 = vpop.f32.mrb[0].mxu0
    %656 = vdwg.mxu0
    %657 = vst [vmem:[%s11] sm:$0xff] %v651
    %658 = vst [vmem:[%s11 + $0x8] sm:$0xff] %v654
  $region53: #{node_model_forward.1} parent=0 // pred_fallthru
    _
  // Predicated region
  $region54: #{node_model_forward.1} parent=0 // pred_check
    _
  $region55: #{node_model_forward.1} parent=0 // pred_check_branch
    %660 = sbr.rel (0) target = $region57
  $region56: #{node_model_forward.1} parent=0 // pred_region
    _
  $region57: #{node_model_forward.1} parent=0 // pred_fallthru
    _
  // Predicated region
  $region58: #{node_model_forward.1} parent=0 // pred_check
    _
  $region59: #{node_model_forward.1} parent=0 // pred_check_branch
    %662 = sbr.rel (0) target = $region61
  $region60: #{node_model_forward.1} parent=0 // pred_region
    _
  $region61: #{node_model_forward.1} parent=0 // pred_fallthru
    _

</llo_original>
